<compile_context>
chip_gen: v7x
topology: tpu7x:2x2x1
jax: 0.10.0
libtpu: 0.0.40
codegen_flags: <defaults>
</compile_context>

<pallas_src>
import math

import jax
import jax.numpy as jnp
from jax.experimental import pallas as pl
from jax.experimental.pallas import tpu as pltpu


def _round_up(n: int, m: int) -> int:
    return ((n + m - 1) // m) * m


def _vmem_budget_bytes() -> int:
    # Per-generation physical VMEM (128 MiB v5e/v6e, 64 MiB per TC on v7x),
    # leaving 25% headroom for compiler-internal scratch / semaphores.
    try:
        cap = int(pltpu.get_tpu_info().vmem_capacity_bytes)
    except Exception:  # pragma: no cover - conservative fallback
        cap = 64 * 1024 * 1024
    return (cap * 3) // 4


def policy_head_kernel(x_ref, w_ref, b_ref, o_ref):
    # x_ref : (TB, D_in)        VMEM  (f32 or bf16)
    # w_ref : (D_in, D_out_pad) VMEM  (zero-padded columns, resident)
    # b_ref : (1, D_out_pad)    VMEM  (f32, zero-padded, resident)
    # o_ref : (TB, D_out_pad)   VMEM  (lane-dense: D_out_pad % 128 == 0)
    y = jnp.dot(x_ref[...], w_ref[...], preferred_element_type=jnp.float32)
    y = y + b_ref[...]                        # bias broadcast, f32
    o_ref[...] = jnp.tanh(y).astype(o_ref.dtype)   # tanh rides the EUP slot


def prepare_policy_params(w_t, b, *, compute_dtype=None):
    """One-time parameter prep — call at init, NOT in the forward.

    Pads the output dim to a multiple of 128 (lane-dense stores) and
    optionally casts the weight to a narrow MXU dtype (bf16 is safe on all
    generations: only the MXU sees it; bias + tanh stay f32).

    w_t : (D_in, D_out)   Linear weight, pre-transposed vs. PyTorch layout
    b   : (D_out,) or (1, D_out)
    returns (w_pad, b_pad, D_out)
    """
    D_in, D_out = w_t.shape
    b = jnp.reshape(b, (1, D_out))
    D_out_pad = _round_up(D_out, 128)
    if D_out_pad != D_out:
        w_t = jnp.pad(w_t, ((0, 0), (0, D_out_pad - D_out)))
        b = jnp.pad(b, ((0, 0), (0, D_out_pad - D_out)))
    if compute_dtype is not None:
        w_t = w_t.astype(compute_dtype)
    return w_t, b.astype(jnp.float32), D_out


def deterministic_policy_head(x, w_pad, b_pad, d_out=None, *,
                              block_batch=None, out_dtype=None,
                              return_padded=False, use_grid=None):
    """Forward pass of DeterministicPolicyHead: tanh(x @ W_pad + b_pad).

    x                : (B, D_in) activations (cast to w_pad.dtype for the MXU)
    w_pad, b_pad     : outputs of prepare_policy_params()
    d_out            : original (unpadded) action size; defaults to padded
    out_dtype        : output store dtype (bf16 cuts output HBM traffic 2x)
    return_padded    : skip the post-call column/row slice (callers consume
                       the padded (B_pad, D_out_pad) buffer directly)
    use_grid         : force (True) / skip (False) the batch-tiled pipeline;
                       None = auto based on total footprint.
    """
    B, D_in = x.shape
    D_in_w, D_out_pad = w_pad.shape
    assert D_in == D_in_w
    assert D_out_pad % 128 == 0, "call prepare_policy_params() once at init"
    if d_out is None:
        d_out = D_out_pad
    out_dtype = out_dtype or x.dtype

    in_dtype = w_pad.dtype                  # bf16 or f32; MXU input dtype
    x_in = x.astype(in_dtype)
    in_bytes = jnp.dtype(in_dtype).itemsize
    out_bytes = jnp.dtype(out_dtype).itemsize

    B8 = _round_up(B, 8)
    total_bytes = (B8 * D_in * in_bytes + D_in * D_out_pad * in_bytes
                   + D_out_pad * 4 + B8 * D_out_pad * out_bytes)

    if use_grid is None:
        use_grid = total_bytes > (4 * 1024 * 1024)

    # ---------------- no-grid fast path (typical tiny head shapes) ----------
    if not use_grid:
        if B8 != B:
            x_in = jnp.pad(x_in, ((0, B8 - B), (0, 0)))
        out = pl.pallas_call(
            policy_head_kernel,
            out_shape=jax.ShapeDtypeStruct((B8, D_out_pad), out_dtype),
        )(x_in, w_pad, b_pad)
        if return_padded:
            return out
        return out[:B, :d_out]

    # ---------------- batch-tiled pipelined path ----------------------------
    if block_batch is None:
        # small D_in -> tiles are tiny; use big tiles so per-step overhead
        # (~0.35 us) amortizes against the HBM stream.
        block_batch = 2048 if D_in <= 256 else 512
    TB = _round_up(min(block_batch, B8), 8)

    # v7x has 2 TensorCores: make sure the "parallel" axis has >= 2 tiles.
    if B8 > 8 and TB >= B8:
        TB = _round_up((B8 + 1) // 2, 8)

    budget = _vmem_budget_bytes()

    def tile_bytes(tb):
        return (2 * tb * D_in * in_bytes            # x, double-buffered
                + 2 * tb * D_out_pad * out_bytes    # out, double-buffered
                + 2 * D_in * D_out_pad * in_bytes   # resident W (2 bufs)
                + 2 * D_out_pad * 4)                # resident bias

    while TB > 8 and tile_bytes(TB) > budget:
        TB = _round_up(TB // 2, 8)

    B_pad = _round_up(B8, TB)
    if B_pad != B:
        x_in = jnp.pad(x_in, ((0, B_pad - B), (0, 0)))
    num_tiles = B_pad // TB

    vmem_limit = min(max(tile_bytes(TB) * 5 // 4, 16 * 1024 * 1024), budget)

    out = pl.pallas_call(
        policy_head_kernel,
        out_shape=jax.ShapeDtypeStruct((B_pad, D_out_pad), out_dtype),
        grid=(num_tiles,),
        in_specs=[
            pl.BlockSpec((TB, D_in), lambda i: (i, 0)),          # streamed x
            pl.BlockSpec((D_in, D_out_pad), lambda i: (0, 0)),   # resident W
            pl.BlockSpec((1, D_out_pad), lambda i: (0, 0)),      # resident b
        ],
        out_specs=pl.BlockSpec((TB, D_out_pad), lambda i: (i, 0)),
        compiler_params=pltpu.CompilerParams(
            dimension_semantics=("parallel",),    # megacore-shardable
            vmem_limit_bytes=vmem_limit,
        ),
    )(x_in, w_pad, b_pad)

    if return_padded:
        return out
    return out[:B, :d_out]


def init_params(key, input_size, action_size, dtype=jnp.float32):
    """Mirrors torch.nn.Linear default init (uniform +-1/sqrt(fan_in))."""
    k_w, k_b = jax.random.split(key)
    bound = 1.0 / math.sqrt(input_size)
    # PyTorch weight is (action_size, input_size); store its transpose.
    w = jax.random.uniform(k_w, (action_size, input_size), dtype,
                           minval=-bound, maxval=bound)
    b = jax.random.uniform(k_b, (action_size,), dtype,
                           minval=-bound, maxval=bound)
    return w.T, b.reshape(1, action_size)


if __name__ == "__main__":
    key = jax.random.PRNGKey(0)
    k_x, k_p, k_x2, k_p2 = jax.random.split(key, 4)

    # --- typical head shape: fast (no-grid) path ---------------------------
    batch, input_size, action_size = 8, 32, 16
    x = jax.random.normal(k_x, (batch, input_size), jnp.float32)
    w_t, b = init_params(k_p, input_size, action_size)
    w_pad, b_pad, d_out = prepare_policy_params(w_t, b)        # once, at init

    out = deterministic_policy_head(x, w_pad, b_pad, d_out)
    out = jax.block_until_ready(out)
    ref = jnp.tanh(x @ w_t + b)
    assert out.shape == (batch, action_size)
    assert jnp.allclose(out, ref, atol=1e-5, rtol=1e-5)

    # --- batch-tiled grid path (forced), exercises padding + >=2 tiles -----
    B2, D2, A2 = 300, 64, 10
    x2 = jax.random.normal(k_x2, (B2, D2), jnp.float32)
    w2_t, b2 = init_params(k_p2, D2, A2)
    w2_pad, b2_pad, d2_out = prepare_policy_params(w2_t, b2)   # once, at init

    out2 = deterministic_policy_head(x2, w2_pad, b2_pad, d2_out,
                                     block_batch=128, use_grid=True)
    out2 = jax.block_until_ready(out2)
    ref2 = jnp.tanh(x2 @ w2_t + b2)
    assert out2.shape == (B2, A2)
    assert jnp.allclose(out2, ref2, atol=1e-5, rtol=1e-5)

    # --- bf16-MXU-input variant (works on v5e/v6e/v7x), looser tolerance ---
    w2_bf16, b2_bf16, _ = prepare_policy_params(w2_t, b2,
                                                compute_dtype=jnp.bfloat16)
    out2_bf16 = deterministic_policy_head(x2, w2_bf16, b2_bf16, d2_out,
                                          block_batch=128, use_grid=True)
    out2_bf16 = jax.block_until_ready(out2_bf16)
    assert jnp.allclose(out2_bf16, ref2, atol=3e-2, rtol=3e-2)

    print("KERNEL_OK")
</pallas_src>

<mosaic_0001>
module attributes {stable_mosaic.version = 11 : i64} {
  func.func @policy_head_kernel(%arg0: memref<8x32xf32, #tpu.memory_space<vmem>>, %arg1: memref<32x128xf32, #tpu.memory_space<vmem>>, %arg2: memref<1x128xf32, #tpu.memory_space<vmem>>, %arg3: memref<8x128xf32, #tpu.memory_space<vmem>>) attributes {dimension_semantics = [], scalar_prefetch = 0 : i64, scratch_operands = 0 : i64, tpu.core_type = #tpu.core_type<tc>} {
    %c0 = arith.constant 0 : index
    %c0_0 = arith.constant 0 : index
    %0 = vector.load %arg0[%c0, %c0_0] : memref<8x32xf32, #tpu.memory_space<vmem>>, vector<8x32xf32>
    %c0_1 = arith.constant 0 : index
    %c0_2 = arith.constant 0 : index
    %1 = vector.load %arg1[%c0_1, %c0_2] : memref<32x128xf32, #tpu.memory_space<vmem>>, vector<32x128xf32>
    %cst = arith.constant dense<0.000000e+00> : vector<8x128xf32>
    %2 = tpu.matmul %0, %1, %cst {dimension_numbers = #tpu.dot_dimension_numbers<[1], [0], [0], [1], [0, 0, 1, 1], [], []>} : vector<8x32xf32>, vector<32x128xf32>, vector<8x128xf32> -> vector<8x128xf32>
    %c0_3 = arith.constant 0 : index
    %c0_4 = arith.constant 0 : index
    %3 = vector.load %arg2[%c0_3, %c0_4] : memref<1x128xf32, #tpu.memory_space<vmem>>, vector<1x128xf32>
    %4 = vector.broadcast %3 : vector<1x128xf32> to vector<8x128xf32>
    %5 = arith.addf %2, %4 : vector<8x128xf32>
    %6 = math.tanh %5 : vector<8x128xf32>
    %c0_5 = arith.constant 0 : index
    %c0_6 = arith.constant 0 : index
    %7 = vector.load %arg3[%c0_5, %c0_6] : memref<8x128xf32, #tpu.memory_space<vmem>>, vector<8x128xf32>
    tpu.vector_store %arg3[%c0_5, %c0_6], %6 {strides = array<i32>} : memref<8x128xf32, #tpu.memory_space<vmem>>, vector<8x128xf32>,
    return
  }
}

</mosaic_0001>

<llo_original>
// kernel: tpu_custom_call.1
$region0: #{tpu_custom_call.1}
  #allocation0 [shape = 'u32[]', space=smem, size = 0x4, offset = 0x4, fixed_abs, tag = 'smem constant byte address 0x4 - core index']
  #allocation1 [shape = 'u32[144,128]{1,0:T(1,128)}', space=vmem, size = 0x12000, scoped, tag = 'internal scratch']
  %s0 = inlined_call_operand.hbm [shape: f32[8,32], index: 0, kind: input, shape index: {}]
  %s1 = inlined_call_operand.hbm [shape: f32[32,128], index: 1, kind: input, shape index: {}]
  %s2 = inlined_call_operand.vmem [shape: f32[1,128], index: 2, kind: input, shape index: {}]
  %s3 = inlined_call_operand.hbm [shape: f32[8,128], index: 3, kind: output, shape index: {}]
  %s4 = sld [smem:[#allocation0]]
  $region30: #{tpu_custom_call.1} parent=0
    _
  %s6 = ssub.s32 1, %s4
  %s7 = scalar_select 0, %s6, %s4
  $region1: #{tpu_custom_call.1} parent=0
    #allocation2 [shape = 'u8[4096]{0}', space=vmem, size = 0x1000, scoped, tag = 'input window, operand 0, single buffered']
    #allocation3 [shape = 's32[1]{0}', space=sflag, size = 0x4, scoped, tag = 'scoped memory for tpu_custom_call.1']
    #allocation4 [shape = 's32[1]{0}', space=sflag, size = 0x4, scoped, tag = 'scoped memory for tpu_custom_call.1']
    #allocation5 [shape = 'u8[16384]{0}', space=vmem, size = 0x4000, scoped, tag = 'input window, operand 1, single buffered']
    #allocation6 [shape = 's32[1]{0}', space=sflag, size = 0x4, scoped, tag = 'scoped memory for tpu_custom_call.1']
    #allocation7 [shape = 'u8[4096]{0}', space=vmem, size = 0x1000, scoped, tag = 'output window, operand 0, single buffered']
    %8 = vsyncpa [#allocation3], 0
    %9 = vsyncpa [#allocation6], 0
    %10 = vsyncpa [#allocation4], 0
    // Predicated region
    $region2: #{tpu_custom_call.1} parent=1 // pred_check
      _
    $region3: #{tpu_custom_call.1} parent=1 // pred_check_branch
      %12 = sbr.rel (0) target = $region5
    $region4: #{tpu_custom_call.1} parent=1 // pred_region
      %s14 = ssub.s32 128, 128
      %15 = vsyncadd [#allocation3], %s14
      %s17 = sshll.u32 [#allocation2], 4
      %s18 = int_to_ptr.vmem [resolvable:$true] %s17
      %20 = dma.hbm_to_vmem [thread:$0]  %s0, 128, %s18, [#allocation3]
    $region5: #{tpu_custom_call.1} parent=1 // pred_fallthru
      _
    // Predicated region
    $region6: #{tpu_custom_call.1} parent=1 // pred_check
      _
    $region7: #{tpu_custom_call.1} parent=1 // pred_check_branch
      %22 = sbr.rel (0) target = $region9
    $region8: #{tpu_custom_call.1} parent=1 // pred_region
      %s24 = ssub.s32 512, 512
      %25 = vsyncadd [#allocation6], %s24
      %s26 = sshll.u32 [#allocation5], 4
      %s27 = int_to_ptr.vmem [resolvable:$true] %s26
      %32 = dma.hbm_to_vmem [thread:$0]  %s1, 512, %s27, [#allocation6], 128, 128, 8
    $region9: #{tpu_custom_call.1} parent=1 // pred_fallthru
      _
    // Predicated region
    $region10: #{tpu_custom_call.1} parent=1 // pred_check
      _
    $region11: #{tpu_custom_call.1} parent=1 // pred_check_branch
      %34 = sbr.rel (0) target = $region13
    $region12: #{tpu_custom_call.1} parent=1 // pred_region
      _
    $region13: #{tpu_custom_call.1} parent=1 // pred_fallthru
      _
    // Predicated region
    $region14: #{tpu_custom_call.1} parent=1 // pred_check
      _
    $region15: #{tpu_custom_call.1} parent=1 // pred_check_branch
      %36 = sbr.rel (0) target = $region17
    $region16: #{tpu_custom_call.1} parent=1 // pred_region
      %37 = dma.done [#allocation3], 128
    $region17: #{tpu_custom_call.1} parent=1 // pred_fallthru
      _
    // Predicated region
    $region18: #{tpu_custom_call.1} parent=1 // pred_check
      _
    $region19: #{tpu_custom_call.1} parent=1 // pred_check_branch
      %39 = sbr.rel (0) target = $region21
    $region20: #{tpu_custom_call.1} parent=1 // pred_region
      %40 = dma.done [#allocation6], 512
    $region21: #{tpu_custom_call.1} parent=1 // pred_fallthru
      _
    %v41 = vld [vmem:[#allocation2] sm:$0xff]
    %v42 = vld [vmem:[#allocation5] sm:$0xff]
    %v43 = vld [vmem:[#allocation5 + $0x8] sm:$0xff]
    %v44 = vld [vmem:[#allocation5 + $0x10] sm:$0xff]
    %v45 = vld [vmem:[#allocation5 + $0x18] sm:$0xff]
    %v46 = vld [vmem:[%s2] sm:$0x1]
    %v48 = vlaneseq
    %v49 = vshrl.u32 %v48, 7
    %v50 = vsub.s32 0, %v49
    %v51 = vrot.slane %v46, %v50
    %vm53 = vcmask 261120
    %v55 = vsel %vm53, %v41, 0
    %57 = vmatprep.subr.mxu0 0.0
    %58 = vmatpush1.msra.mxu0 %v42
    %59 = vmatprep.subr.mxu0 0.0
    %60 = vmatpush1.msra.mxu0 %v43
    %61 = vmatprep.subr.mxu0 0.0
    %62 = vmatpush1.msra.mxu0 %v44
    %63 = vmatprep.subr.mxu0 0.0
    %64 = vmatpush1.msra.mxu0 %v45
    %65 = vmatprep.subr.mxu0 0.0
    %66 = vmatpush1.msra.mxu0 0.0
    %67 = vmatprep.subr.mxu0 0.0
    %68 = vmatpush1.msra.mxu0 0.0
    %69 = vmatprep.subr.mxu0 0.0
    %70 = vmatpush1.msra.mxu0 0.0
    %71 = vmatprep.subr.mxu0 0.0
    %72 = vmatpush1.msra.mxu0 0.0
    %73 = vmatprep.subr.mxu0 0.0
    %74 = vmatpush1.msra.mxu0 0.0
    %75 = vmatprep.subr.mxu0 0.0
    %76 = vmatpush1.msra.mxu0 0.0
    %77 = vmatprep.subr.mxu0 0.0
    %78 = vmatpush1.msra.mxu0 0.0
    %79 = vmatprep.subr.mxu0 0.0
    %80 = vmatpush1.msra.mxu0 0.0
    %81 = vmatprep.subr.mxu0 0.0
    %82 = vmatpush1.msra.mxu0 0.0
    %83 = vmatprep.subr.mxu0 0.0
    %84 = vmatpush1.msra.mxu0 0.0
    %85 = vmatprep.subr.mxu0 0.0
    %86 = vmatpush1.msra.mxu0 0.0
    %87 = vmatprep.subr.mxu0 0.0
    %88 = vmatpush1.msra.mxu0 0.0
    %89 = vmatprep.subr.mxu0 0.0
    %90 = vmatpush1.msra.mxu0 0.0
    %91 = vmatprep.subr.mxu0 0.0
    %92 = vmatpush1.msra.mxu0 0.0
    %93 = vmatprep.subr.mxu0 0.0
    %94 = vmatpush1.msra.mxu0 0.0
    %95 = vmatprep.subr.mxu0 0.0
    %96 = vmatpush1.msra.mxu0 0.0
    %97 = vmatprep.subr.mxu0 0.0
    %98 = vmatpush1.msra.mxu0 0.0
    %99 = vmatprep.subr.mxu0 0.0
    %100 = vmatpush1.msra.mxu0 0.0
    %101 = vmatprep.subr.mxu0 0.0
    %102 = vmatpush1.msra.mxu0 0.0
    %103 = vmatprep.subr.mxu0 0.0
    %104 = vmatpush1.msra.mxu0 0.0
    %105 = vmatprep.subr.mxu0 0.0
    %106 = vmatpush1.msra.mxu0 0.0
    %107 = vmatprep.subr.mxu0 0.0
    %108 = vmatpush1.msra.mxu0 0.0
    %109 = vmatprep.subr.mxu0 0.0
    %110 = vmatpush1.msra.mxu0 0.0
    %111 = vmatprep.subr.mxu0 0.0
    %112 = vmatpush1.msra.mxu0 0.0
    %113 = vmatprep.subr.mxu0 0.0
    %114 = vmatpush1.msra.mxu0 0.0
    %115 = vmatprep.subr.mxu0 0.0
    %116 = vmatpush1.msra.mxu0 0.0
    %117 = vmatprep.subr.mxu0 0.0
    %118 = vmatpush1.msra.mxu0 0.0
    %119 = vmatprep.subr.mxu0 0.0
    %120 = vmatpush1.msra.mxu0 0.0
    %121 = vmatprep.mubr.f32.mxu0 0.0
    %122 = vmatmul.mubr.f32.gmra.mrb[0].mxu0 %v55
    %v123 = vpop.f32.mrb[0].mxu0
    %v124 = vadd.f32 %v51, %v123
    %v125 = vpop.f32.mrb[0].mxu0
    %126 = vdwg.mxu0
    %v127 = vtanh.pop %v124
    %128 = vst [vmem:[#allocation7] sm:$0xff] %v127
    // Predicated region
    $region22: #{tpu_custom_call.1} parent=1 // pred_check
      _
    $region23: #{tpu_custom_call.1} parent=1 // pred_check_branch
      %130 = sbr.rel (0) target = $region25
    $region24: #{tpu_custom_call.1} parent=1 // pred_region
      %s132 = ssub.s32 128, 128
      %133 = vsyncadd [#allocation4], %s132
      %s135 = sshll.u32 [#allocation7], 4
      %s136 = int_to_ptr.vmem [resolvable:$true] %s135
      %138 = dma.vmem_to_hbm [thread:$0]  %s136, 128, %s3, [#allocation4]
    $region25: #{tpu_custom_call.1} parent=1 // pred_fallthru
      _
    // Predicated region
    $region26: #{tpu_custom_call.1} parent=1 // pred_check
      _
    $region27: #{tpu_custom_call.1} parent=1 // pred_check_branch
      %140 = sbr.rel (0) target = $region29
    $region28: #{tpu_custom_call.1} parent=1 // pred_region
      %141 = dma.done [#allocation4], 128
    $region29: #{tpu_custom_call.1} parent=1 // pred_fallthru
      _
    %142 = vsyncpa [#allocation3], 1
    %143 = vsyncpa [#allocation6], 1
    %144 = vsyncpa [#allocation4], 1

</llo_original>
